<compile_context>
chip_gen: v5e
topology: v5e:2x2
jax: 0.10.0
libtpu: 0.0.40
codegen_flags: <defaults>
</compile_context>

<pallas_src>
import functools

import jax
import jax.numpy as jnp
from jax.experimental import pallas as pl
from jax.experimental.pallas import tpu as pltpu


def _round_up(x, m):
    return (x + m - 1) // m * m


def _decoder_kernel(x_ref, w1_ref, bgb_ref, w2_ref, b2_ref, ml_ref,
                    prob_ref, loss_ref, *, pad_id):
    # x_ref    (TR, H)   bf16 hiddens tile
    # w1_ref   (H, H)    bf16 Linear1 weight  [in, out]
    # bgb_ref  (3, H)    f32 rows: [b1, ln_gamma, ln_beta]
    # w2_ref   (H, Tp)   bf16 Linear2 weight  [in, out], lane-padded
    # b2_ref   (1, Tp)   f32 Linear2 bias, padded cols = -1e30
    # ml_ref   (TR, Tp)  int8/int16/int32 per-row (label*2 + mask), broadcast across tag lanes
    # prob_ref (TR, Tp)  f32 softmax probabilities (padded lanes ~0)
    # loss_ref (8, 128)  f32: [0,0] = sum(nll*valid), [0,1] = sum(valid), rest 0
    x = x_ref[...]                                    # bf16
    b1 = bgb_ref[0:1, :]                              # f32
    gamma = bgb_ref[1:2, :]
    beta = bgb_ref[2:3, :]

    # Linear(H, H) + ReLU  (bf16 MXU, f32 accumulate; everything after stays f32)
    h = jnp.dot(x, w1_ref[...], preferred_element_type=jnp.float32) + b1
    h = jnp.maximum(h, 0.0)

    # LayerNorm(H), eps = 1e-5, affine -- f32 VPU/EUP path
    mu = jnp.mean(h, axis=-1, keepdims=True)
    var = jnp.mean((h - mu) * (h - mu), axis=-1, keepdims=True)
    h = (h - mu) * jax.lax.rsqrt(var + 1e-5)
    h = h * gamma + beta

    # Linear(H, num_tags) -- lane-padded; padded columns carry a -1e30 bias
    logits = jnp.dot(h.astype(jnp.bfloat16), w2_ref[...],
                     preferred_element_type=jnp.float32) + b2_ref[...]

    # unpack per-row mask / label (already lane-broadcast across the tag lanes)
    packed = ml_ref[...].astype(jnp.int32)
    mask = (packed & 1).astype(jnp.float32)           # (TR, Tp), 1.0 = keep
    labels = packed >> 1                              # (TR, Tp)

    # logits += (1 - mask).unsqueeze(-1) * -1e32
    logits = logits + (1.0 - mask) * (-1e32)

    # softmax over tags (padded columns underflow to exactly 0); denominator on the EUP
    m = jnp.max(logits, axis=-1, keepdims=True)
    e = jnp.exp(logits - m)
    s = jnp.sum(e, axis=-1, keepdims=True)
    prob_ref[...] = e * pl.reciprocal(s, approx=True)

    # fused CrossEntropy(ignore_index=pad_id) partial sums for this tile
    lse = m + jnp.log(s)
    tag_iota = jax.lax.broadcasted_iota(jnp.int32, logits.shape, 1)
    onehot = (tag_iota == labels).astype(jnp.float32)
    picked = jnp.sum(logits * onehot, axis=-1, keepdims=True)
    nll = lse - picked                                # (TR, 1)
    valid = (labels[:, 0:1] != pad_id).astype(jnp.float32)   # (TR, 1)
    nll_sum = jnp.sum(nll * valid, keepdims=True)     # (1, 1)
    valid_sum = jnp.sum(valid, keepdims=True)         # (1, 1)

    r = jax.lax.broadcasted_iota(jnp.int32, loss_ref.shape, 0)
    c = jax.lax.broadcasted_iota(jnp.int32, loss_ref.shape, 1)
    loss_ref[...] = jnp.where((r == 0) & (c == 0), nll_sum,
                              jnp.where((r == 0) & (c == 1), valid_sum, 0.0))


@functools.partial(jax.jit, static_argnames=("pad_id", "row_tile"))
def slu_tagging_forward(hiddens, tag_mask, tag_ids, params, *, pad_id, row_tile=512):
    """hiddens: [B, S, H] f32; tag_mask: [B, S] f32; tag_ids: [B, S] int32.

    row_tile: 512 default (fits the v7x 64 MiB VMEM); v5e/v6e can pass 1024.
    """
    B, S, H = hiddens.shape
    T = params["w2"].shape[1]
    Tp = _round_up(T, 128)
    N = B * S

    # Row tiling: always keep >= 2 grid steps (v7x has 2 TensorCores and
    # dimension_semantics=('parallel',) only helps with >= 2 steps), and keep the tile a
    # multiple of 32 rows so bf16 activations / int8 bookkeeping stay tile-aligned.
    row_tile = min(row_tile, max(32, _round_up((N + 1) // 2, 32)))
    Np = max(_round_up(N, row_tile), 2 * row_tile)
    num_tiles = Np // row_tile

    # ---- activations: flatten, pad, cast to bf16 for the MXU ----
    x = jnp.pad(hiddens.reshape(N, H), ((0, Np - N), (0, 0))).astype(jnp.bfloat16)

    # ---- mask/label packed into one small int per row, lane-broadcast across tag lanes ----
    labels_flat = tag_ids.reshape(N).astype(jnp.int32)
    mask_flat = tag_mask.reshape(N).astype(jnp.int32)
    packed = labels_flat * 2 + mask_flat
    # padded rows get label = pad_id, mask = 0 so the fused loss ignores them
    packed = jnp.pad(packed, (0, Np - N), constant_values=pad_id * 2)
    max_packed = max(2 * (T - 1) + 1, 2 * pad_id)
    if max_packed <= 127:
        packed_dtype, packed_bytes = jnp.int8, 1
    elif max_packed <= 32767:
        packed_dtype, packed_bytes = jnp.int16, 2
    else:
        packed_dtype, packed_bytes = jnp.int32, 4
    packed = jnp.broadcast_to(packed.astype(packed_dtype)[:, None], (Np, Tp))

    # ---- params: bf16 matmul weights; f32 biases / LayerNorm affine ----
    w1 = params["w1"].astype(jnp.bfloat16)                                       # (H, H)
    bgb = jnp.stack([params["b1"], params["ln_g"], params["ln_b"]], 0)           # (3, H) f32
    bgb = bgb.astype(jnp.float32)
    w2 = jnp.pad(params["w2"], ((0, 0), (0, Tp - T))).astype(jnp.bfloat16)       # (H, Tp)
    b2 = jnp.pad(params["b2"], (0, Tp - T),
                 constant_values=-1e30).reshape(1, Tp).astype(jnp.float32)

    rows = lambda i: (i, 0)
    full = lambda i: (0, 0)
    resident = pl.Buffered(1)   # grid-invariant operands: fetched once, single VMEM buffer

    # VMEM budget: single-buffered weights + double-buffered streaming tiles + f32 temporaries,
    # with 2x headroom, clamped to [8 MiB, 32 MiB] (never request the whole v7x 64 MiB core).
    vmem_need = (
        (H * H + H * Tp) * 2 + (3 * H + Tp) * 4                     # resident weights
        + 2 * row_tile * (H * 2 + Tp * packed_bytes + Tp * 4)       # x / packed / prob streams
        + 2 * 8 * 128 * 4                                           # loss partial blocks
        + row_tile * (4 * H + 4 * Tp) * 4                           # f32 temporaries headroom
    )
    vmem_limit = int(min(max(2 * vmem_need, 8 * 1024 * 1024), 32 * 1024 * 1024))

    prob_pad, loss_parts = pl.pallas_call(
        functools.partial(_decoder_kernel, pad_id=pad_id),
        out_shape=(
            jax.ShapeDtypeStruct((Np, Tp), jnp.float32),
            jax.ShapeDtypeStruct((num_tiles * 8, 128), jnp.float32),
        ),
        grid_spec=pltpu.PrefetchScalarGridSpec(
            num_scalar_prefetch=0,
            grid=(num_tiles,),
            in_specs=[
                pl.BlockSpec((row_tile, H), rows),                            # x (bf16)
                pl.BlockSpec((H, H), full, pipeline_mode=resident),           # w1 (bf16)
                pl.BlockSpec((3, H), full, pipeline_mode=resident),           # [b1; gamma; beta]
                pl.BlockSpec((H, Tp), full, pipeline_mode=resident),          # w2 (bf16, padded)
                pl.BlockSpec((1, Tp), full, pipeline_mode=resident),          # b2 (padded)
                pl.BlockSpec((row_tile, Tp), rows),                           # packed mask/label
            ],
            out_specs=[
                pl.BlockSpec((row_tile, Tp), rows),                           # prob slab
                pl.BlockSpec((8, 128), rows),                                 # loss partials
            ],
        ),
        compiler_params=pltpu.CompilerParams(
            dimension_semantics=("parallel",),
            vmem_limit_bytes=vmem_limit,
        ),
    )(x, w1, bgb, w2, b2, packed)

    prob = prob_pad[:N, :T].reshape(B, S, T)

    # CrossEntropyLoss(ignore_index=pad_id), reduction='mean' over non-ignored rows,
    # assembled from the per-tile partial sums emitted by the kernel.
    loss = jnp.sum(loss_parts[:, 0]) / jnp.maximum(jnp.sum(loss_parts[:, 1]), 1.0)
    return prob, loss


def _reference(hiddens, tag_mask, tag_ids, params, pad_id):
    """Pure-JAX f32 reference for correctness checking."""
    T = params["w2"].shape[1]
    h = hiddens @ params["w1"] + params["b1"]
    h = jnp.maximum(h, 0.0)
    mu = jnp.mean(h, axis=-1, keepdims=True)
    var = jnp.mean((h - mu) ** 2, axis=-1, keepdims=True)
    h = (h - mu) / jnp.sqrt(var + 1e-5) * params["ln_g"] + params["ln_b"]
    logits = h @ params["w2"] + params["b2"]
    logits = logits + (1.0 - tag_mask)[..., None] * (-1e32)
    prob = jax.nn.softmax(logits, axis=-1)
    flat_logits = logits.reshape(-1, T)
    flat_labels = tag_ids.reshape(-1)
    lse = jax.nn.logsumexp(flat_logits, axis=-1)
    picked = jnp.take_along_axis(flat_logits, flat_labels[:, None], axis=-1)[:, 0]
    nll = lse - picked
    valid = (flat_labels != pad_id).astype(jnp.float32)
    loss = jnp.sum(nll * valid) / jnp.maximum(jnp.sum(valid), 1.0)
    return prob, loss


if __name__ == "__main__":
    # TODO(synk): BERT tokenizer remap + transformers.BertModel encoder have no Pallas
    # equivalent (pretrained HF model); the encoder output `hiddens` is synthesized here.
    # TODO(synk): nn.Dropout is treated as identity (eval mode).
    B, S, H, NUM_TAGS, PAD_ID = 2, 8, 32, 16, 0

    key = jax.random.PRNGKey(0)
    k_h, k_w1, k_b1, k_w2, k_b2, k_lab = jax.random.split(key, 6)

    hiddens = jax.random.normal(k_h, (B, S, H), dtype=jnp.float32)

    params = {
        "w1": jax.random.normal(k_w1, (H, H), dtype=jnp.float32) * 0.05,
        "b1": jax.random.normal(k_b1, (H,), dtype=jnp.float32) * 0.05,
        "ln_g": jnp.ones((H,), dtype=jnp.float32),
        "ln_b": jnp.zeros((H,), dtype=jnp.float32),
        "w2": jax.random.normal(k_w2, (H, NUM_TAGS), dtype=jnp.float32) * 0.05,
        "b2": jax.random.normal(k_b2, (NUM_TAGS,), dtype=jnp.float32) * 0.05,
    }

    # lengths = [8, 5]; mask 1 for real tokens, 0 for padding; labels PAD_ID on padding.
    lengths = jnp.array([8, 5], dtype=jnp.int32)
    pos = jnp.arange(S)[None, :]
    tag_mask = (pos < lengths[:, None]).astype(jnp.float32)
    rand_labels = jax.random.randint(k_lab, (B, S), 1, NUM_TAGS, dtype=jnp.int32)
    tag_ids = jnp.where(tag_mask > 0, rand_labels, PAD_ID)

    prob, loss = slu_tagging_forward(hiddens, tag_mask, tag_ids, params, pad_id=PAD_ID)
    jax.block_until_ready((prob, loss))

    prob_ref, loss_ref = _reference(hiddens, tag_mask, tag_ids, params, PAD_ID)
    assert prob.shape == (B, S, NUM_TAGS)
    # tolerances account for bf16 MXU inputs and the EUP approximate softmax reciprocal
    assert jnp.allclose(prob, prob_ref, atol=2e-2, rtol=2e-2)
    assert jnp.allclose(loss, loss_ref, atol=3e-2, rtol=3e-2)

    print("KERNEL_OK")
</pallas_src>

<mosaic_0001>
module attributes {stable_mosaic.version = 11 : i64} {
  func.func @_decoder_kernel(%arg0: i32, %arg1: memref<32x32xbf16, #tpu.memory_space<vmem>>, %arg2: memref<32x32xbf16, #tpu.memory_space<vmem>>, %arg3: memref<3x32xf32, #tpu.memory_space<vmem>>, %arg4: memref<32x128xbf16, #tpu.memory_space<vmem>>, %arg5: memref<1x128xf32, #tpu.memory_space<vmem>>, %arg6: memref<32x128xi8, #tpu.memory_space<vmem>>, %arg7: memref<32x128xf32, #tpu.memory_space<vmem>>, %arg8: memref<8x128xf32, #tpu.memory_space<vmem>>) attributes {dimension_semantics = [#tpu.dimension_semantics<parallel>], iteration_bounds = array<i64: 2>, scalar_prefetch = 0 : i64, scratch_operands = 0 : i64, tpu.core_type = #tpu.core_type<tc>, window_params = [{transform_indices = @transform_0, window_bounds = array<i64: 32, 32>}, {pipeline_mode = #tpu.pipeline_mode<synchronous>, transform_indices = @transform_1, window_bounds = array<i64: 32, 32>}, {pipeline_mode = #tpu.pipeline_mode<synchronous>, transform_indices = @transform_2, window_bounds = array<i64: 3, 32>}, {pipeline_mode = #tpu.pipeline_mode<synchronous>, transform_indices = @transform_3, window_bounds = array<i64: 32, 128>}, {pipeline_mode = #tpu.pipeline_mode<synchronous>, transform_indices = @transform_4, window_bounds = array<i64: 1, 128>}, {transform_indices = @transform_5, window_bounds = array<i64: 32, 128>}, {transform_indices = @transform_6, window_bounds = array<i64: 32, 128>}, {transform_indices = @transform_7, window_bounds = array<i64: 8, 128>}]} {
    %c0 = arith.constant 0 : index
    %c0_0 = arith.constant 0 : index
    %0 = vector.load %arg1[%c0, %c0_0] : memref<32x32xbf16, #tpu.memory_space<vmem>>, vector<32x32xbf16>
    %c0_1 = arith.constant 0 : index
    %c0_2 = arith.constant 0 : index
    %1 = vector.load %arg3[%c0_1, %c0_2] : memref<3x32xf32, #tpu.memory_space<vmem>>, vector<1x32xf32>
    %c1 = arith.constant 1 : index
    %c0_3 = arith.constant 0 : index
    %2 = vector.load %arg3[%c1, %c0_3] : memref<3x32xf32, #tpu.memory_space<vmem>>, vector<1x32xf32>
    %c2 = arith.constant 2 : index
    %c0_4 = arith.constant 0 : index
    %3 = vector.load %arg3[%c2, %c0_4] : memref<3x32xf32, #tpu.memory_space<vmem>>, vector<1x32xf32>
    %c0_5 = arith.constant 0 : index
    %c0_6 = arith.constant 0 : index
    %4 = vector.load %arg2[%c0_5, %c0_6] : memref<32x32xbf16, #tpu.memory_space<vmem>>, vector<32x32xbf16>
    %cst = arith.constant dense<0.000000e+00> : vector<32x32xf32>
    %5 = tpu.matmul %0, %4, %cst {dimension_numbers = #tpu.dot_dimension_numbers<[1], [0], [0], [1], [0, 0, 1, 1], [], []>} : vector<32x32xbf16>, vector<32x32xbf16>, vector<32x32xf32> -> vector<32x32xf32>
    %6 = vector.broadcast %1 : vector<1x32xf32> to vector<32x32xf32>
    %7 = arith.addf %5, %6 : vector<32x32xf32>
    %cst_7 = arith.constant 0.000000e+00 : f32
    %8 = vector.broadcast %cst_7 : f32 to vector<32x32xf32>
    %9 = arith.maximumf %7, %8 : vector<32x32xf32>
    %cst_8 = arith.constant dense<0.000000e+00> : vector<32xf32>
    %10 = vector.multi_reduction <add>, %9, %cst_8 [1] : vector<32x32xf32> to vector<32xf32>
    %11 = vector.shape_cast %10 : vector<32xf32> to vector<32x1xf32>
    %cst_9 = arith.constant 3.200000e+01 : f32
    %12 = vector.broadcast %cst_9 : f32 to vector<32x1xf32>
    %13 = arith.divf %11, %12 : vector<32x1xf32>
    %14 = vector.broadcast %13 : vector<32x1xf32> to vector<32x32xf32>
    %15 = arith.subf %9, %14 : vector<32x32xf32>
    %16 = vector.broadcast %13 : vector<32x1xf32> to vector<32x32xf32>
    %17 = arith.subf %9, %16 : vector<32x32xf32>
    %18 = arith.mulf %15, %17 : vector<32x32xf32>
    %cst_10 = arith.constant dense<0.000000e+00> : vector<32xf32>
    %19 = vector.multi_reduction <add>, %18, %cst_10 [1] : vector<32x32xf32> to vector<32xf32>
    %20 = vector.shape_cast %19 : vector<32xf32> to vector<32x1xf32>
    %cst_11 = arith.constant 3.200000e+01 : f32
    %21 = vector.broadcast %cst_11 : f32 to vector<32x1xf32>
    %22 = arith.divf %20, %21 : vector<32x1xf32>
    %23 = vector.broadcast %13 : vector<32x1xf32> to vector<32x32xf32>
    %24 = arith.subf %9, %23 : vector<32x32xf32>
    %cst_12 = arith.constant 9.99999974E-6 : f32
    %25 = vector.broadcast %cst_12 : f32 to vector<32x1xf32>
    %26 = arith.addf %22, %25 : vector<32x1xf32>
    %27 = math.rsqrt %26 : vector<32x1xf32>
    %28 = vector.broadcast %27 : vector<32x1xf32> to vector<32x32xf32>
    %29 = arith.mulf %24, %28 : vector<32x32xf32>
    %30 = vector.broadcast %2 : vector<1x32xf32> to vector<32x32xf32>
    %31 = arith.mulf %29, %30 : vector<32x32xf32>
    %32 = vector.broadcast %3 : vector<1x32xf32> to vector<32x32xf32>
    %33 = arith.addf %31, %32 : vector<32x32xf32>
    %34 = arith.truncf %33 : vector<32x32xf32> to vector<32x32xbf16>
    %c0_13 = arith.constant 0 : index
    %c0_14 = arith.constant 0 : index
    %35 = vector.load %arg4[%c0_13, %c0_14] : memref<32x128xbf16, #tpu.memory_space<vmem>>, vector<32x128xbf16>
    %cst_15 = arith.constant dense<0.000000e+00> : vector<32x128xf32>
    %36 = tpu.matmul %34, %35, %cst_15 {dimension_numbers = #tpu.dot_dimension_numbers<[1], [0], [0], [1], [0, 0, 1, 1], [], []>} : vector<32x32xbf16>, vector<32x128xbf16>, vector<32x128xf32> -> vector<32x128xf32>
    %c0_16 = arith.constant 0 : index
    %c0_17 = arith.constant 0 : index
    %37 = vector.load %arg5[%c0_16, %c0_17] : memref<1x128xf32, #tpu.memory_space<vmem>>, vector<1x128xf32>
    %38 = vector.broadcast %37 : vector<1x128xf32> to vector<32x128xf32>
    %39 = arith.addf %36, %38 : vector<32x128xf32>
    %c0_18 = arith.constant 0 : index
    %c0_19 = arith.constant 0 : index
    %40 = vector.load %arg6[%c0_18, %c0_19] : memref<32x128xi8, #tpu.memory_space<vmem>>, vector<32x128xi8>
    %41 = arith.extsi %40 : vector<32x128xi8> to vector<32x128xi32>
    %c1_i32 = arith.constant 1 : i32
    %42 = vector.broadcast %c1_i32 : i32 to vector<32x128xi32>
    %43 = arith.andi %41, %42 : vector<32x128xi32>
    %44 = arith.sitofp %43 : vector<32x128xi32> to vector<32x128xf32>
    %c1_i32_20 = arith.constant 1 : i32
    %45 = vector.broadcast %c1_i32_20 : i32 to vector<32x128xi32>
    %46 = arith.shrsi %41, %45 : vector<32x128xi32>
    %cst_21 = arith.constant 1.000000e+00 : f32
    %47 = vector.broadcast %cst_21 : f32 to vector<32x128xf32>
    %48 = arith.subf %47, %44 : vector<32x128xf32>
    %cst_22 = arith.constant -1.000000e+32 : f32
    %49 = vector.broadcast %cst_22 : f32 to vector<32x128xf32>
    %50 = arith.mulf %48, %49 : vector<32x128xf32>
    %51 = arith.addf %39, %50 : vector<32x128xf32>
    %cst_23 = arith.constant dense<0xFF800000> : vector<32xf32>
    %52 = vector.multi_reduction <maximumf>, %51, %cst_23 [1] : vector<32x128xf32> to vector<32xf32>
    %53 = vector.shape_cast %52 : vector<32xf32> to vector<32x1xf32>
    %54 = vector.broadcast %53 : vector<32x1xf32> to vector<32x128xf32>
    %55 = arith.subf %51, %54 : vector<32x128xf32>
    %56 = math.exp %55 : vector<32x128xf32>
    %cst_24 = arith.constant dense<0.000000e+00> : vector<32xf32>
    %57 = vector.multi_reduction <add>, %56, %cst_24 [1] : vector<32x128xf32> to vector<32xf32>
    %58 = vector.shape_cast %57 : vector<32xf32> to vector<32x1xf32>
    %59 = tpu.reciprocal %58 {approx = true} : vector<32x1xf32> -> vector<32x1xf32>
    %60 = vector.broadcast %59 : vector<32x1xf32> to vector<32x128xf32>
    %61 = arith.mulf %56, %60 : vector<32x128xf32>
    %c0_25 = arith.constant 0 : index
    %c0_26 = arith.constant 0 : index
    %62 = vector.load %arg7[%c0_25, %c0_26] : memref<32x128xf32, #tpu.memory_space<vmem>>, vector<32x128xf32>
    tpu.vector_store %arg7[%c0_25, %c0_26], %61 {strides = array<i32>} : memref<32x128xf32, #tpu.memory_space<vmem>>, vector<32x128xf32>,
    %63 = math.log %58 : vector<32x1xf32>
    %64 = arith.addf %53, %63 : vector<32x1xf32>
    %65 = tpu.iota {dimensions = array<i32: 1>} : vector<32x128xi32>
    %66 = arith.cmpi eq, %65, %46 : vector<32x128xi32>
    %67 = arith.extui %66 : vector<32x128xi1> to vector<32x128xi32>
    %68 = arith.sitofp %67 : vector<32x128xi32> to vector<32x128xf32>
    %69 = arith.mulf %51, %68 : vector<32x128xf32>
    %cst_27 = arith.constant dense<0.000000e+00> : vector<32xf32>
    %70 = vector.multi_reduction <add>, %69, %cst_27 [1] : vector<32x128xf32> to vector<32xf32>
    %71 = vector.shape_cast %70 : vector<32xf32> to vector<32x1xf32>
    %72 = arith.subf %64, %71 : vector<32x1xf32>
    %73 = vector.extract_strided_slice %46 {offsets = [0, 0], sizes = [32, 1], strides = [1, 1]} : vector<32x128xi32> to vector<32x1xi32>
    %c0_i32 = arith.constant 0 : i32
    %74 = vector.broadcast %c0_i32 : i32 to vector<32x1xi32>
    %75 = arith.cmpi ne, %73, %74 : vector<32x1xi32>
    %76 = arith.extui %75 : vector<32x1xi1> to vector<32x1xi32>
    %77 = arith.sitofp %76 : vector<32x1xi32> to vector<32x1xf32>
    %78 = arith.mulf %72, %77 : vector<32x1xf32>
    %79 = vector.shape_cast %78 : vector<32x1xf32> to vector<1x32x1xf32>
    %cst_28 = arith.constant dense<0.000000e+00> : vector<1xf32>
    %80 = vector.multi_reduction <add>, %79, %cst_28 [1, 2] : vector<1x32x1xf32> to vector<1xf32>
    %81 = vector.shape_cast %80 : vector<1xf32> to vector<1x1x1xf32>
    %82 = vector.extract %81[0, 0, 0] : f32 from vector<1x1x1xf32>
    %83 = vector.broadcast %82 : f32 to vector<1x1xf32>
    %84 = vector.shape_cast %77 : vector<32x1xf32> to vector<1x32x1xf32>
    %cst_29 = arith.constant dense<0.000000e+00> : vector<1xf32>
    %85 = vector.multi_reduction <add>, %84, %cst_29 [1, 2] : vector<1x32x1xf32> to vector<1xf32>
    %86 = vector.shape_cast %85 : vector<1xf32> to vector<1x1x1xf32>
    %87 = vector.extract %86[0, 0, 0] : f32 from vector<1x1x1xf32>
    %88 = vector.broadcast %87 : f32 to vector<1x1xf32>
    %89 = tpu.iota {dimensions = array<i32: 0>} : vector<8x128xi32>
    %90 = tpu.iota {dimensions = array<i32: 1>} : vector<8x128xi32>
    %c0_i32_30 = arith.constant 0 : i32
    %91 = vector.broadcast %c0_i32_30 : i32 to vector<8x128xi32>
    %92 = arith.cmpi eq, %89, %91 : vector<8x128xi32>
    %c0_i32_31 = arith.constant 0 : i32
    %93 = vector.broadcast %c0_i32_31 : i32 to vector<8x128xi32>
    %94 = arith.cmpi eq, %90, %93 : vector<8x128xi32>
    %95 = arith.andi %92, %94 : vector<8x128xi1>
    %c0_i32_32 = arith.constant 0 : i32
    %96 = vector.broadcast %c0_i32_32 : i32 to vector<8x128xi32>
    %97 = arith.cmpi eq, %89, %96 : vector<8x128xi32>
    %c1_i32_33 = arith.constant 1 : i32
    %98 = vector.broadcast %c1_i32_33 : i32 to vector<8x128xi32>
    %99 = arith.cmpi eq, %90, %98 : vector<8x128xi32>
    %100 = arith.andi %97, %99 : vector<8x128xi1>
    %cst_34 = arith.constant 0.000000e+00 : f32
    %101 = vector.shape_cast %88 : vector<1x1xf32> to vector<1x1xf32>
    %102 = vector.broadcast %101 : vector<1x1xf32> to vector<8x128xf32>
    %103 = vector.broadcast %cst_34 : f32 to vector<8x128xf32>
    %104 = arith.select %100, %102, %103 : vector<8x128xi1>, vector<8x128xf32>
    %105 = vector.shape_cast %83 : vector<1x1xf32> to vector<1x1xf32>
    %106 = vector.broadcast %105 : vector<1x1xf32> to vector<8x128xf32>
    %107 = arith.select %95, %106, %104 : vector<8x128xi1>, vector<8x128xf32>
    %c0_35 = arith.constant 0 : index
    %c0_36 = arith.constant 0 : index
    %108 = vector.load %arg8[%c0_35, %c0_36] : memref<8x128xf32, #tpu.memory_space<vmem>>, vector<8x128xf32>
    tpu.vector_store %arg8[%c0_35, %c0_36], %107 {strides = array<i32>} : memref<8x128xf32, #tpu.memory_space<vmem>>, vector<8x128xf32>,
    return
  }
  func.func @transform_0(%arg0: i32) -> (i32, i32) {
    %c0_i32 = arith.constant 0 : i32
    %c0_i32_0 = arith.constant 0 : i32
    return %arg0, %c0_i32 : i32, i32
  }
  func.func @transform_1(%arg0: i32) -> (i32, i32) {
    %c0_i32 = arith.constant 0 : i32
    %c0_i32_0 = arith.constant 0 : i32
    %c0_i32_1 = arith.constant 0 : i32
    return %c0_i32, %c0_i32_0 : i32, i32
  }
  func.func @transform_2(%arg0: i32) -> (i32, i32) {
    %c0_i32 = arith.constant 0 : i32
    %c0_i32_0 = arith.constant 0 : i32
    %c0_i32_1 = arith.constant 0 : i32
    return %c0_i32, %c0_i32_0 : i32, i32
  }
  func.func @transform_3(%arg0: i32) -> (i32, i32) {
    %c0_i32 = arith.constant 0 : i32
    %c0_i32_0 = arith.constant 0 : i32
    %c0_i32_1 = arith.constant 0 : i32
    return %c0_i32, %c0_i32_0 : i32, i32
  }
  func.func @transform_4(%arg0: i32) -> (i32, i32) {
    %c0_i32 = arith.constant 0 : i32
    %c0_i32_0 = arith.constant 0 : i32
    %c0_i32_1 = arith.constant 0 : i32
    return %c0_i32, %c0_i32_0 : i32, i32
  }
  func.func @transform_5(%arg0: i32) -> (i32, i32) {
    %c0_i32 = arith.constant 0 : i32
    %c0_i32_0 = arith.constant 0 : i32
    return %arg0, %c0_i32 : i32, i32
  }
  func.func @transform_6(%arg0: i32) -> (i32, i32) {
    %c0_i32 = arith.constant 0 : i32
    %c0_i32_0 = arith.constant 0 : i32
    return %arg0, %c0_i32 : i32, i32
  }
  func.func @transform_7(%arg0: i32) -> (i32, i32) {
    %c0_i32 = arith.constant 0 : i32
    %c0_i32_0 = arith.constant 0 : i32
    return %arg0, %c0_i32 : i32, i32
  }
}

</mosaic_0001>

<llo_original>
// kernel: slu_tagging_forward.1
$region0: #{slu_tagging_forward.1}
  #allocation0 [shape = 'u32[]', space=smem, size = 0x4, offset = 0x4, fixed_abs, tag = 'smem constant byte address 0x4 - core index']
  #allocation1 [shape = 'u32[72,128]{1,0:T(1,128)}', space=vmem, size = 0x9000, scoped, tag = 'internal scratch']
  %s0 = inlined_call_operand.vmem [shape: bf16[64,32], index: 0, kind: input, shape index: {}]
  %s1 = inlined_call_operand.vmem [shape: bf16[32,32], index: 1, kind: input, shape index: {}]
  %s2 = inlined_call_operand.vmem [shape: f32[3,32], index: 2, kind: input, shape index: {}]
  %s3 = inlined_call_operand.vmem [shape: bf16[32,128], index: 3, kind: input, shape index: {}]
  %s4 = inlined_call_operand.vmem [shape: f32[1,128], index: 4, kind: input, shape index: {}]
  %s5 = inlined_call_operand.vmem [shape: s8[64,128], index: 5, kind: input, shape index: {}]
  %s6 = inlined_call_operand.vmem [shape: f32[64,128], index: 6, kind: output, shape index: {0}]
  %s7 = inlined_call_operand.vmem [shape: f32[16,128], index: 7, kind: output, shape index: {1}]
  %8 = xla_tuple %s6, %s7
  %s9 = sld [smem:[#allocation0]]
  $region65: #{slu_tagging_forward.1} parent=0
    _
  %s11 = ssub.s32 1, %s9
  %s12 = scalar_select 0, %s11, %s9
  loop: start=0, step=1, limit=4
  $region2: #{slu_tagging_forward.1} parent=0 // loop_pre_header
    _
  $region3: #{slu_tagging_forward.1} parent=0 // loop_header
    %s14 = sphi 0, %s18
    %p15 = scmp.ge.s32.totalorder %s14, 4
    %s24 = sphi 0, %s26
    %s27 = sphi 0, %s24
    %s28 = sphi 0, %s27
    %s44 = sphi 0, %s28
    %s48 = sphi 0, %s48
    %s50 = sphi 0, %s48
    %s51 = sphi 0, %s50
    %s65 = sphi 0, %s51
    %s69 = sphi 0, %s69
    %s71 = sphi 0, %s69
    %s72 = sphi 0, %s71
    %s86 = sphi 0, %s72
    %s90 = sphi 0, %s90
    %s92 = sphi 0, %s90
    %s93 = sphi 0, %s92
    %s107 = sphi 0, %s93
    %s111 = sphi 0, %s111
    %s113 = sphi 0, %s111
    %s114 = sphi 0, %s113
    %s128 = sphi 0, %s114
    %s134 = sphi 0, %s136
    %s137 = sphi 0, %s134
    %s138 = sphi 0, %s137
    %s154 = sphi 0, %s138
    %s160 = sphi 0, %s162
    %s163 = sphi 0, %s160
    %s164 = sphi 0, %s163
    %s180 = sphi 0, %s164
    %s186 = sphi 0, %s188
    %s189 = sphi 0, %s186
    %s190 = sphi 0, %s189
    %s206 = sphi 0, %s190
  $region4: #{slu_tagging_forward.1} parent=0 // loop_header_branch
    %17 = sbr.rel (%p15) target = $region8
  $region5: #{slu_tagging_forward.1} parent=0 // loop_body
    %s19 = ssub.s32 %s14, 1
    %s20 = ssub.s32 %s14, 2
    %s21 = sadd.s32 %s14, 1
    %s22 = ssub.s32 %s14, %s21
    %p23 = scmp.eq.s32.totalorder %s22, 0
    %s25 = sadd.s32 %s24, 1
    %s26 = scalar_select %p23, %s24, %s25
    %p29 = pneg %p23
    %p30 = scmp.eq.s32.totalorder %s14, 1
    %p31 = por %p29, %p30
    %p32 = scmp.ne.s32.totalorder %s24, %s27
    %p33 = scmp.eq.s32.totalorder %s14, 0
    %p34 = por %p32, %p33
    %p35 = scmp.ne.s32.totalorder %s24, %s27
    %p36 = scmp.eq.s32.totalorder %s19, 1
    %p37 = por %p35, %p36
    %p38 = scmp.ne.s32.totalorder %s27, %s28
    %p39 = scmp.eq.s32.totalorder %s19, 0
    %p40 = por %p38, %p39
    %p41 = scmp.ne.s32.totalorder %s27, %s28
    %p42 = scmp.eq.s32.totalorder %s20, 1
    %p43 = por %p41, %p42
    %p45 = scmp.ne.s32.totalorder %s28, %s44
    %p46 = scmp.eq.s32.totalorder %s20, 0
    %p47 = por %p45, %p46
    %s49 = sadd.s32 %s48, 1
    %p52 = scmp.eq.s32.totalorder %s14, 1
    %p53 = scmp.ne.s32.totalorder %s48, %s50
    %p54 = scmp.eq.s32.totalorder %s14, 0
    %p55 = por %p53, %p54
    %p56 = scmp.ne.s32.totalorder %s48, %s50
    %p57 = scmp.eq.s32.totalorder %s19, 1
    %p58 = por %p56, %p57
    %p59 = scmp.ne.s32.totalorder %s50, %s51
    %p60 = scmp.eq.s32.totalorder %s19, 0
    %p61 = por %p59, %p60
    %p62 = scmp.ne.s32.totalorder %s50, %s51
    %p63 = scmp.eq.s32.totalorder %s20, 1
    %p64 = por %p62, %p63
    %p66 = scmp.ne.s32.totalorder %s51, %s65
    %p67 = scmp.eq.s32.totalorder %s20, 0
    %p68 = por %p66, %p67
    %s70 = sadd.s32 %s69, 1
    %p73 = scmp.eq.s32.totalorder %s14, 1
    %p74 = scmp.ne.s32.totalorder %s69, %s71
    %p75 = scmp.eq.s32.totalorder %s14, 0
    %p76 = por %p74, %p75
    %p77 = scmp.ne.s32.totalorder %s69, %s71
    %p78 = scmp.eq.s32.totalorder %s19, 1
    %p79 = por %p77, %p78
    %p80 = scmp.ne.s32.totalorder %s71, %s72
    %p81 = scmp.eq.s32.totalorder %s19, 0
    %p82 = por %p80, %p81
    %p83 = scmp.ne.s32.totalorder %s71, %s72
    %p84 = scmp.eq.s32.totalorder %s20, 1
    %p85 = por %p83, %p84
    %p87 = scmp.ne.s32.totalorder %s72, %s86
    %p88 = scmp.eq.s32.totalorder %s20, 0
    %p89 = por %p87, %p88
    %s91 = sadd.s32 %s90, 1
    %p94 = scmp.eq.s32.totalorder %s14, 1
    %p95 = scmp.ne.s32.totalorder %s90, %s92
    %p96 = scmp.eq.s32.totalorder %s14, 0
    %p97 = por %p95, %p96
    %p98 = scmp.ne.s32.totalorder %s90, %s92
    %p99 = scmp.eq.s32.totalorder %s19, 1
    %p100 = por %p98, %p99
    %p101 = scmp.ne.s32.totalorder %s92, %s93
    %p102 = scmp.eq.s32.totalorder %s19, 0
    %p103 = por %p101, %p102
    %p104 = scmp.ne.s32.totalorder %s92, %s93
    %p105 = scmp.eq.s32.totalorder %s20, 1
    %p106 = por %p104, %p105
    %p108 = scmp.ne.s32.totalorder %s93, %s107
    %p109 = scmp.eq.s32.totalorder %s20, 0
    %p110 = por %p108, %p109
    %s112 = sadd.s32 %s111, 1
    %p115 = scmp.eq.s32.totalorder %s14, 1
    %p116 = scmp.ne.s32.totalorder %s111, %s113
    %p117 = scmp.eq.s32.totalorder %s14, 0
    %p118 = por %p116, %p117
    %p119 = scmp.ne.s32.totalorder %s111, %s113
    %p120 = scmp.eq.s32.totalorder %s19, 1
    %p121 = por %p119, %p120
    %p122 = scmp.ne.s32.totalorder %s113, %s114
    %p123 = scmp.eq.s32.totalorder %s19, 0
    %p124 = por %p122, %p123
    %p125 = scmp.ne.s32.totalorder %s113, %s114
    %p126 = scmp.eq.s32.totalorder %s20, 1
    %p127 = por %p125, %p126
    %p129 = scmp.ne.s32.totalorder %s114, %s128
    %p130 = scmp.eq.s32.totalorder %s20, 0
    %p131 = por %p129, %p130
    %s132 = ssub.s32 %s14, %s21
    %p133 = scmp.eq.s32.totalorder %s132, 0
    %s135 = sadd.s32 %s134, 1
    %s136 = scalar_select %p133, %s134, %s135
    %p139 = pneg %p133
    %p140 = scmp.eq.s32.totalorder %s14, 1
    %p141 = por %p139, %p140
    %p142 = scmp.ne.s32.totalorder %s134, %s137
    %p143 = scmp.eq.s32.totalorder %s14, 0
    %p144 = por %p142, %p143
    %p145 = scmp.ne.s32.totalorder %s134, %s137
    %p146 = scmp.eq.s32.totalorder %s19, 1
    %p147 = por %p145, %p146
    %p148 = scmp.ne.s32.totalorder %s137, %s138
    %p149 = scmp.eq.s32.totalorder %s19, 0
    %p150 = por %p148, %p149
    %p151 = scmp.ne.s32.totalorder %s137, %s138
    %p152 = scmp.eq.s32.totalorder %s20, 1
    %p153 = por %p151, %p152
    %p155 = scmp.ne.s32.totalorder %s138, %s154
    %p156 = scmp.eq.s32.totalorder %s20, 0
    %p157 = por %p155, %p156
    %s158 = ssub.s32 %s14, %s21
    %p159 = scmp.eq.s32.totalorder %s158, 0
    %s161 = sadd.s32 %s160, 1
    %s162 = scalar_select %p159, %s160, %s161
    %p165 = pneg %p159
    %p166 = scmp.eq.s32.totalorder %s14, 1
    %p167 = por %p165, %p166
    %p168 = scmp.ne.s32.totalorder %s160, %s163
    %p169 = scmp.eq.s32.totalorder %s14, 0
    %p170 = por %p168, %p169
    %p171 = scmp.ne.s32.totalorder %s160, %s163
    %p172 = scmp.eq.s32.totalorder %s19, 1
    %p173 = por %p171, %p172
    %p174 = scmp.ne.s32.totalorder %s163, %s164
    %p175 = scmp.eq.s32.totalorder %s19, 0
    %p176 = por %p174, %p175
    %p177 = scmp.ne.s32.totalorder %s163, %s164
    %p178 = scmp.eq.s32.totalorder %s20, 1
    %p179 = por %p177, %p178
    %p181 = scmp.ne.s32.totalorder %s164, %s180
    %p182 = scmp.eq.s32.totalorder %s20, 0
    %p183 = por %p181, %p182
    %s184 = ssub.s32 %s14, %s21
    %p185 = scmp.eq.s32.totalorder %s184, 0
    %s187 = sadd.s32 %s186, 1
    %s188 = scalar_select %p185, %s186, %s187
    %p191 = pneg %p185
    %p192 = scmp.eq.s32.totalorder %s14, 1
    %p193 = por %p191, %p192
    %p194 = scmp.ne.s32.totalorder %s186, %s189
    %p195 = scmp.eq.s32.totalorder %s14, 0
    %p196 = por %p194, %p195
    %p197 = scmp.ne.s32.totalorder %s186, %s189
    %p198 = scmp.eq.s32.totalorder %s19, 1
    %p199 = por %p197, %p198
    %p200 = scmp.ne.s32.totalorder %s189, %s190
    %p201 = scmp.eq.s32.totalorder %s19, 0
    %p202 = por %p200, %p201
    %p203 = scmp.ne.s32.totalorder %s189, %s190
    %p204 = scmp.eq.s32.totalorder %s20, 1
    %p205 = por %p203, %p204
    %p207 = scmp.ne.s32.totalorder %s190, %s206
    %p208 = scmp.eq.s32.totalorder %s20, 0
    %p209 = por %p207, %p208
    %p210 = scmp.le.s32.totalorder 1, %s14
    %p211 = scmp.lt.s32.totalorder %s14, 3
    %p212 = pnand %p210, %p211
    %p213 = pneg %p212
    // Predicated region
    $region9: #{slu_tagging_forward.1} parent=5 // pred_check
      _
    $region10: #{slu_tagging_forward.1} parent=5 // pred_check_branch
      %215 = sbr.rel (%p212) target = $region12
    $region11: #{slu_tagging_forward.1} parent=5 // pred_region
      %s216 = ssub.s32 %s14, 1
      // Predicated region
      $region13: #{slu_tagging_forward.1} parent=11 // pred_check
        %p217 = pneg %p61
      $region14: #{slu_tagging_forward.1} parent=11 // pred_check_branch
        %219 = sbr.rel (%p217) target = $region16
      $region15: #{slu_tagging_forward.1} parent=11 // pred_region
        _
      $region16: #{slu_tagging_forward.1} parent=11 // pred_fallthru
        _
      // Predicated region
      $region17: #{slu_tagging_forward.1} parent=11 // pred_check
        %p220 = pneg %p82
      $region18: #{slu_tagging_forward.1} parent=11 // pred_check_branch
        %222 = sbr.rel (%p220) target = $region20
      $region19: #{slu_tagging_forward.1} parent=11 // pred_region
        _
      $region20: #{slu_tagging_forward.1} parent=11 // pred_fallthru
        _
      // Predicated region
      $region21: #{slu_tagging_forward.1} parent=11 // pred_check
        %p223 = pneg %p103
      $region22: #{slu_tagging_forward.1} parent=11 // pred_check_branch
        %225 = sbr.rel (%p223) target = $region24
      $region23: #{slu_tagging_forward.1} parent=11 // pred_region
        _
      $region24: #{slu_tagging_forward.1} parent=11 // pred_fallthru
        _
      // Predicated region
      $region25: #{slu_tagging_forward.1} parent=11 // pred_check
        %p226 = pneg %p124
      $region26: #{slu_tagging_forward.1} parent=11 // pred_check_branch
        %228 = sbr.rel (%p226) target = $region28
      $region27: #{slu_tagging_forward.1} parent=11 // pred_region
        _
      $region28: #{slu_tagging_forward.1} parent=11 // pred_fallthru
        _
    $region12: #{slu_tagging_forward.1} parent=5 // pred_fallthru
      _
    %p229 = scmp.lt.s32.totalorder %s14, 2
    // Predicated region
    $region29: #{slu_tagging_forward.1} parent=5 // pred_check
      %p230 = pneg %p229
    $region30: #{slu_tagging_forward.1} parent=5 // pred_check_branch
      %232 = sbr.rel (%p230) target = $region32
    $region31: #{slu_tagging_forward.1} parent=5 // pred_region
      // Predicated region
      $region33: #{slu_tagging_forward.1} parent=31 // pred_check
        %p233 = pneg %p34
      $region34: #{slu_tagging_forward.1} parent=31 // pred_check_branch
        %235 = sbr.rel (%p233) target = $region36
      $region35: #{slu_tagging_forward.1} parent=31 // pred_region
        %s236 = smul.u32 4, %s14
        %p237 = scmp.lt.s32.totalorder %s236, 7
        %s238 = scalar_select %p237, %s236, 7
        %s239 = smul.addr %s238, 4
        %s240 = scalar_lea.vmem %s0, %s239
        %s241 = smul.u32 4, %s14
      $region36: #{slu_tagging_forward.1} parent=31 // pred_fallthru
        _
      // Predicated region
      $region37: #{slu_tagging_forward.1} parent=31 // pred_check
        %p242 = pneg %p144
      $region38: #{slu_tagging_forward.1} parent=31 // pred_check_branch
        %244 = sbr.rel (%p242) target = $region40
      $region39: #{slu_tagging_forward.1} parent=31 // pred_region
        %p245 = scmp.lt.s32.totalorder %s14, 1
        %s246 = scalar_select %p245, %s14, 1
        %s247 = smul.addr %s246, 8
        %s248 = scalar_lea.vmem %s5, %s247
      $region40: #{slu_tagging_forward.1} parent=31 // pred_fallthru
        _
    $region32: #{slu_tagging_forward.1} parent=5 // pred_fallthru
      _
    %p249 = scmp.le.s32.totalorder 1, %s14
    %p250 = scmp.lt.s32.totalorder %s14, 3
    %p251 = pnand %p249, %p250
    %p252 = pneg %p251
    // Predicated region
    $region41: #{slu_tagging_forward.1} parent=5 // pred_check
      _
    $region42: #{slu_tagging_forward.1} parent=5 // pred_check_branch
      %254 = sbr.rel (%p251) target = $region44
    $region43: #{slu_tagging_forward.1} parent=5 // pred_region
      %s255 = ssub.s32 %s14, 1
      %s256 = smul.u32 4, %s19
      %p257 = scmp.lt.s32.totalorder %s256, 7
      %s258 = scalar_select %p257, %s256, 7
      %s259 = smul.addr %s258, 4
      %s260 = scalar_lea.vmem %s0, %s259
      %p261 = pneg %p40
      %p262 = pneg %p37
      %p263 = pneg %p61
      %p264 = pneg %p58
      %p265 = pneg %p82
      %p266 = pneg %p79
      %p267 = pneg %p103
      %p268 = pneg %p100
      %p269 = pneg %p124
      %p270 = pneg %p121
      %p271 = scmp.lt.s32.totalorder %s19, 1
      %s272 = scalar_select %p271, %s19, 1
      %s273 = smul.addr %s272, 8
      %s274 = scalar_lea.vmem %s5, %s273
      %p275 = pneg %p150
      %p276 = pneg %p147
      %p277 = pneg %p176
      %p278 = pneg %p173
      %s279 = smul.u32 4, %s19
      %p280 = scmp.lt.s32.totalorder %s279, 7
      %s281 = scalar_select %p280, %s279, 7
      %s282 = smul.addr %s281, 8
      %s283 = scalar_lea.vmem %s6, %s282
      %p284 = pneg %p202
      %p285 = pneg %p199
      %p286 = scmp.lt.s32.totalorder %s19, 1
      %s287 = scalar_select %p286, %s19, 1
      %s288 = smul.addr %s287, 8
      %s289 = scalar_lea.vmem %s7, %s288
      %s290 = smul.u32 4, %s19
      %p291 = scmp.lt.s32.totalorder %s290, 7
      %s292 = scalar_select %p291, %s290, 7
      %s293 = smul.addr %s292, 4
      %s294 = scalar_lea.vmem %s0, %s293
      %s295 = smul.u32 4, %s19
      %p296 = scmp.lt.s32.totalorder %s19, 1
      %s297 = scalar_select %p296, %s19, 1
      %s298 = smul.addr %s297, 8
      %s299 = scalar_lea.vmem %s5, %s298
      %s300 = smul.u32 4, %s19
      %p301 = scmp.lt.s32.totalorder %s300, 7
      %s302 = scalar_select %p301, %s300, 7
      %s303 = smul.addr %s302, 8
      %s304 = scalar_lea.vmem %s6, %s303
      %s305 = smul.u32 4, %s19
      %p306 = scmp.lt.s32.totalorder %s19, 1
      %s307 = scalar_select %p306, %s19, 1
      %s308 = smul.addr %s307, 8
      %s309 = scalar_lea.vmem %s7, %s308
      %v311 = vld [vmem:[%s294] sm:$0xf]
      %v312 = vld [vmem:[%s294 + $0x4] sm:$0xf]
      %v313 = vld [vmem:[%s294 + $0x8] sm:$0xf]
      %v314 = vld [vmem:[%s294 + $0xc] sm:$0xf]
      %v315 = vld [vmem:[%s2] sm:$0x1]
      %v316 = vld [vmem:[%s2 + $0x1] sm:$0x1]
      %v317 = vld [vmem:[%s2 + $0x2] sm:$0x1]
      %v318 = vld [vmem:[%s1] sm:$0xf]
      %v319 = vld [vmem:[%s1 + $0x4] sm:$0xf]
      %v320 = vld [vmem:[%s1 + $0x8] sm:$0xf]
      %v321 = vld [vmem:[%s1 + $0xc] sm:$0xf]
      %v322 = vperm.slane %v315, 0
      %v327 = vunpack.c.l.b16 %v311
      %v328 = vunpack.c.l.b16 %v312
      %v329 = vunpack.c.l.b16 %v313
      %v330 = vunpack.c.l.b16 %v314
      %v331 = vpack.c.b16 %v328, %v327
      %v332 = vpack.c.b16 %v330, %v329
      %v337 = vunpack.c.l.b16 %v318
      %v338 = vunpack.c.l.b16 %v319
      %v339 = vunpack.c.l.b16 %v320
      %v340 = vunpack.c.l.b16 %v321
      %v341 = vpack.c.b16 %v338, %v337
      %v342 = vpack.c.b16 %v340, %v339
      %vm345 = vcmask 261120
      %v347 = vsel %vm345, %v331, 0
      %v350 = vsel %vm345, %v332, 0
      %352 = vmatpush.bf16.msra.mxu0 0
      %353 = vmatpush.bf16.msra.mxu0 0
      %354 = vmatpush.bf16.msra.mxu0 0
      %355 = vmatpush.bf16.msra.mxu0 0
      %356 = vmatpush.bf16.msra.mxu0 0
      %357 = vmatpush.bf16.msra.mxu0 0
      %358 = vmatpush.bf16.msra.mxu0 %v342
      %359 = vmatpush.bf16.msra.mxu0 %v341
      %360 = vmatmul.bf16.gmra.mxu0 %v347
      %v361 = vpop.f32.mrf.mxu0
      %v362 = vadd.f32 %v322, %v361
      %v363 = vpop.f32.mrf.mxu0
      %v364 = vadd.f32 %v322, %v363
      %365 = vmatmul.bf16.gmra.mxu0 %v350
      %v366 = vpop.f32.mrf.mxu0
      %v367 = vadd.f32 %v322, %v366
      %v368 = vpop.f32.mrf.mxu0
      %v369 = vadd.f32 %v322, %v368
      %370 = vdwg.mxu0
      %v371 = vmax.f32 %v362, 0.0
      %v372 = vmax.f32 %v364, 0.0
      %v373 = vmax.f32 %v367, 0.0
      %v374 = vmax.f32 %v369, 0.0
      %v375 = vsel %vm345, %v371, 0.0
      %376 = vadd.xlane.f32.xlu0 %v375
      %v377 = vpop.xlane.xlu0 %376
      %v378 = vsel %vm345, %v372, 0.0
      %379 = vadd.xlane.f32.xlu0 %v378
      %v380 = vpop.xlane.xlu0 %379
      %v381 = vsel %vm345, %v373, 0.0
      %382 = vadd.xlane.f32.xlu0 %v381
      %v383 = vpop.xlane.xlu0 %382
      %v384 = vsel %vm345, %v374, 0.0
      %385 = vadd.xlane.f32.xlu0 %v384
      %v386 = vpop.xlane.xlu0 %385
      %v387 = vrcp.pop 32.0
      %v388 = vmul.f32 32.0, %v387
      %v389 = vsub.f32 1.0, %v388
      %v390 = vmul.f32 %v387, %v389
      %v391 = vadd.f32 %v387, %v390
      %vm392 = vweird.f32 %v387
      %v393 = vsel %vm392, %v387, %v391
      %v394 = vmul.f32 %v377, %v393
      %v395 = vmul.f32 %v380, %v393
      %v396 = vmul.f32 %v383, %v393
      %v397 = vmul.f32 %v386, %v393
      %v398 = vsub.f32 %v371, %v394
      %v399 = vsub.f32 %v372, %v395
      %v400 = vsub.f32 %v373, %v396
      %v401 = vsub.f32 %v374, %v397
      %v402 = vmul.f32 %v398, %v398
      %v403 = vmul.f32 %v399, %v399
      %v404 = vmul.f32 %v400, %v400
      %v405 = vmul.f32 %v401, %v401
      %v406 = vsel %vm345, %v402, 0.0
      %407 = vadd.xlane.f32.xlu0 %v406
      %v408 = vpop.xlane.xlu0 %407
      %v409 = vsel %vm345, %v403, 0.0
      %410 = vadd.xlane.f32.xlu0 %v409
      %v411 = vpop.xlane.xlu0 %410
      %v412 = vsel %vm345, %v404, 0.0
      %413 = vadd.xlane.f32.xlu0 %v412
      %v414 = vpop.xlane.xlu0 %413
      %v415 = vsel %vm345, %v405, 0.0
      %416 = vadd.xlane.f32.xlu0 %v415
      %v417 = vpop.xlane.xlu0 %416
      %v418 = vmul.f32 %v408, %v393
      %v419 = vmul.f32 %v411, %v393
      %v420 = vmul.f32 %v414, %v393
      %v421 = vmul.f32 %v417, %v393
      %v422 = vadd.f32 %v418, 1e-05
      %v423 = vadd.f32 %v419, 1e-05
      %v424 = vadd.f32 %v420, 1e-05
      %v425 = vadd.f32 %v421, 1e-05
      %v426 = vrsqrt.pop %v422
      %v427 = vmul.f32 %v426, %v422
      %v428 = vmul.f32 %v427, %v426
      %v429 = vmul.f32 0.5, %v428
      %v430 = vsub.f32 1.5, %v429
      %v431 = vmul.f32 %v426, %v430
      %vm432 = vweird.f32 %v422
      %vm433 = vweird.f32 %v426
      %vm434 = vmor %vm432, %vm433
      %v435 = vsel %vm434, %v426, %v431
      %v436 = vrsqrt.pop %v423
      %v437 = vmul.f32 %v436, %v423
      %v438 = vmul.f32 %v437, %v436
      %v439 = vmul.f32 0.5, %v438
      %v440 = vsub.f32 1.5, %v439
      %v441 = vmul.f32 %v436, %v440
      %vm442 = vweird.f32 %v423
      %vm443 = vweird.f32 %v436
      %vm444 = vmor %vm442, %vm443
      %v445 = vsel %vm444, %v436, %v441
      %v446 = vrsqrt.pop %v424
      %v447 = vmul.f32 %v446, %v424
      %v448 = vmul.f32 %v447, %v446
      %v449 = vmul.f32 0.5, %v448
      %v450 = vsub.f32 1.5, %v449
      %v451 = vmul.f32 %v446, %v450
      %vm452 = vweird.f32 %v424
      %vm453 = vweird.f32 %v446
      %vm454 = vmor %vm452, %vm453
      %v455 = vsel %vm454, %v446, %v451
      %v456 = vrsqrt.pop %v425
      %v457 = vmul.f32 %v456, %v425
      %v458 = vmul.f32 %v457, %v456
      %v459 = vmul.f32 0.5, %v458
      %v460 = vsub.f32 1.5, %v459
      %v461 = vmul.f32 %v456, %v460
      %vm462 = vweird.f32 %v425
      %vm463 = vweird.f32 %v456
      %vm464 = vmor %vm462, %vm463
      %v465 = vsel %vm464, %v456, %v461
      %v466 = vmul.f32 %v398, %v435
      %v467 = vmul.f32 %v399, %v445
      %v468 = vmul.f32 %v400, %v455
      %v469 = vmul.f32 %v401, %v465
      %v470 = vperm.slane %v316, 0
      %v471 = vmul.f32 %v466, %v470
      %v472 = vmul.f32 %v467, %v470
      %v473 = vmul.f32 %v468, %v470
      %v474 = vmul.f32 %v469, %v470
      %v475 = vperm.slane %v317, 0
      %v476 = vadd.f32 %v471, %v475
      %v477 = vadd.f32 %v472, %v475
      %v478 = vadd.f32 %v473, %v475
      %v479 = vadd.f32 %v474, %v475
      %v480 = vpack.c.bf16 %v477, %v476
      %v481 = vpack.c.bf16 %v479, %v478
      %v482 = vld [vmem:[%s3] sm:$0xf]
      %v483 = vld [vmem:[%s3 + $0x4] sm:$0xf]
      %v484 = vld [vmem:[%s3 + $0x8] sm:$0xf]
      %v485 = vld [vmem:[%s3 + $0xc] sm:$0xf]
      %v486 = vld [vmem:[%s4] sm:$0x1]
      %v488 = vperm.slane %v486, 0
      %v494 = vunpack.c.l.b16 %v482
      %v495 = vunpack.c.l.b16 %v483
      %v496 = vunpack.c.l.b16 %v484
      %v497 = vunpack.c.l.b16 %v485
      %v498 = vpack.c.b16 %v495, %v494
      %v499 = vpack.c.b16 %v497, %v496
      %v503 = vsel %vm345, %v480, 0
      %v506 = vsel %vm345, %v481, 0
      %508 = vmatpush.bf16.msra.mxu0 0
      %509 = vmatpush.bf16.msra.mxu0 0
      %510 = vmatpush.bf16.msra.mxu0 0
      %511 = vmatpush.bf16.msra.mxu0 0
      %512 = vmatpush.bf16.msra.mxu0 0
      %513 = vmatpush.bf16.msra.mxu0 0
      %514 = vmatpush.bf16.msra.mxu0 %v499
      %515 = vmatpush.bf16.msra.mxu0 %v498
      %516 = vmatmul.bf16.gmra.mxu0 %v503
      %v517 = vpop.f32.mrf.mxu0
      %v518 = vadd.f32 %v488, %v517
      %v519 = vpop.f32.mrf.mxu0
      %v520 = vadd.f32 %v488, %v519
      %521 = vmatmul.bf16.gmra.mxu0 %v506
      %v522 = vpop.f32.mrf.mxu0
      %v523 = vadd.f32 %v488, %v522
      %v524 = vpop.f32.mrf.mxu0
      %v525 = vadd.f32 %v488, %v524
      %526 = vdwg.mxu0
      %v527 = vld [vmem:[%s299] sm:$0xff]
      %v528 = vunpack.c.0.s8 %v527
      %v529 = vunpack.c.1.s8 %v527
      %v530 = vunpack.c.2.s8 %v527
      %v531 = vunpack.c.3.s8 %v527
      %v532 = vand.u32 %v528, 1
      %v533 = vand.u32 %v529, 1
      %v534 = vand.u32 %v530, 1
      %v535 = vand.u32 %v531, 1
      %v536 = vcvt.s32.f32 %v532
      %v537 = vcvt.s32.f32 %v533
      %v538 = vcvt.s32.f32 %v534
      %v539 = vcvt.s32.f32 %v535
      %v540 = vshra.s32 %v528, 1
      %v541 = vshra.s32 %v529, 1
      %v542 = vshra.s32 %v530, 1
      %v543 = vshra.s32 %v531, 1
      %v544 = vsub.f32 1.0, %v536
      %v545 = vsub.f32 1.0, %v537
      %v546 = vsub.f32 1.0, %v538
      %v547 = vsub.f32 1.0, %v539
      %v548 = vmul.f32 %v544, -1e+32
      %v549 = vmul.f32 %v545, -1e+32
      %v550 = vmul.f32 %v546, -1e+32
      %v551 = vmul.f32 %v547, -1e+32
      %v552 = vadd.f32 %v518, %v548
      %v553 = vadd.f32 %v520, %v549
      %v554 = vadd.f32 %v523, %v550
      %v555 = vadd.f32 %v525, %v551
      %556 = vmax.xlane.f32.xlu0 %v552
      %v557 = vpop.xlane.xlu0 %556
      %558 = vmax.xlane.f32.xlu0 %v553
      %v559 = vpop.xlane.xlu0 %558
      %560 = vmax.xlane.f32.xlu0 %v554
      %v561 = vpop.xlane.xlu0 %560
      %562 = vmax.xlane.f32.xlu0 %v555
      %v563 = vpop.xlane.xlu0 %562
      %v564 = vsub.f32 %v552, %v557
      %v565 = vsub.f32 %v553, %v559
      %v566 = vsub.f32 %v554, %v561
      %v567 = vsub.f32 %v555, %v563
      %v568 = vmul.f32 %v564, 1.442695
      %v569 = vpow.pop %v568
      %v570 = vmul.f32 %v565, 1.442695
      %v571 = vpow.pop %v570
      %v572 = vmul.f32 %v566, 1.442695
      %v573 = vpow.pop %v572
      %v574 = vmul.f32 %v567, 1.442695
      %v575 = vpow.pop %v574
      %576 = vadd.xlane.f32.xlu0 %v569
      %v577 = vpop.xlane.xlu0 %576
      %578 = vadd.xlane.f32.xlu0 %v571
      %v579 = vpop.xlane.xlu0 %578
      %580 = vadd.xlane.f32.xlu0 %v573
      %v581 = vpop.xlane.xlu0 %580
      %582 = vadd.xlane.f32.xlu0 %v575
      %v583 = vpop.xlane.xlu0 %582
      %v584 = vrcp.pop %v577
      %v585 = vrcp.pop %v579
      %v586 = vrcp.pop %v581
      %v587 = vrcp.pop %v583
      %v588 = vmul.f32 %v569, %v584
      %v589 = vmul.f32 %v571, %v585
      %v590 = vmul.f32 %v573, %v586
      %v591 = vmul.f32 %v575, %v587
      %592 = vst [vmem:[%s304] sm:$0xff] %v588
      %593 = vst [vmem:[%s304 + $0x8] sm:$0xff] %v589
      %594 = vst [vmem:[%s304 + $0x10] sm:$0xff] %v590
      %595 = vst [vmem:[%s304 + $0x18] sm:$0xff] %v591
      %v596 = vlog2.pop %v577
      %v597 = vmul.f32 %v596, 0.6931472
      %v598 = vlog2.pop %v579
      %v599 = vmul.f32 %v598, 0.6931472
      %v600 = vlog2.pop %v581
      %v601 = vmul.f32 %v600, 0.6931472
      %v602 = vlog2.pop %v583
      %v603 = vmul.f32 %v602, 0.6931472
      %v604 = vadd.f32 %v557, %v597
      %v605 = vadd.f32 %v559, %v599
      %v606 = vadd.f32 %v561, %v601
      %v607 = vadd.f32 %v563, %v603
      %v608 = vlaneseq
      %v609 = vand.u32 %v608, 127
      %vm610 = vcmp.eq.s32.totalorder %v609, %v540
      %vm611 = vcmp.eq.s32.totalorder %v609, %v541
      %vm612 = vcmp.eq.s32.totalorder %v609, %v542
      %vm613 = vcmp.eq.s32.totalorder %v609, %v543
      %v614 = vsel %vm610, 1, 0
      %v615 = vsel %vm611, 1, 0
      %v616 = vsel %vm612, 1, 0
      %v617 = vsel %vm613, 1, 0
      %v618 = vcvt.s32.f32 %v614
      %v619 = vcvt.s32.f32 %v615
      %v620 = vcvt.s32.f32 %v616
      %v621 = vcvt.s32.f32 %v617
      %v622 = vmul.f32 %v552, %v618
      %v623 = vmul.f32 %v553, %v619
      %v624 = vmul.f32 %v554, %v620
      %v625 = vmul.f32 %v555, %v621
      %626 = vadd.xlane.f32.xlu0 %v622
      %v627 = vpop.xlane.xlu0 %626
      %628 = vadd.xlane.f32.xlu0 %v623
      %v629 = vpop.xlane.xlu0 %628
      %630 = vadd.xlane.f32.xlu0 %v624
      %v631 = vpop.xlane.xlu0 %630
      %632 = vadd.xlane.f32.xlu0 %v625
      %v633 = vpop.xlane.xlu0 %632
      %v634 = vsub.f32 %v604, %v627
      %v635 = vsub.f32 %v605, %v629
      %v636 = vsub.f32 %v606, %v631
      %v637 = vsub.f32 %v607, %v633
      %vm638 = vcmp.ne.s32.totalorder %v540, 0
      %vm639 = vcmp.ne.s32.totalorder %v541, 0
      %vm640 = vcmp.ne.s32.totalorder %v542, 0
      %vm641 = vcmp.ne.s32.totalorder %v543, 0
      %v642 = vsel %vm638, 1, 0
      %v643 = vsel %vm639, 1, 0
      %v644 = vsel %vm640, 1, 0
      %v645 = vsel %vm641, 1, 0
      %v646 = vcvt.s32.f32 %v642
      %v647 = vcvt.s32.f32 %v643
      %v648 = vcvt.s32.f32 %v644
      %v649 = vcvt.s32.f32 %v645
      %v650 = vmul.f32 %v634, %v646
      %v651 = vmul.f32 %v635, %v647
      %v652 = vmul.f32 %v636, %v648
      %v653 = vmul.f32 %v637, %v649
      %vm654 = vcmask 7168
      %v655 = vsel %vm654, %v650, 0.0
      %v656 = vsel %vm654, %v651, 0.0
      %v657 = vadd.f32 %v655, %v656
      %v658 = vsel %vm654, %v652, 0.0
      %v659 = vadd.f32 %v657, %v658
      %v660 = vsel %vm654, %v653, 0.0
      %v661 = vadd.f32 %v659, %v660
      %662 = vadd.xlane.f32.xlu0 %v661
      %v663 = vpop.xlane.xlu0 %662
      %v664 = vrot.slane %v663, 4
      %v665 = vadd.f32 %v663, %v664
      %v666 = vrot.slane %v665, 2
      %v667 = vadd.f32 %v665, %v666
      %v668 = vrot.slane %v667, 1
      %v669 = vadd.f32 %v667, %v668
      %s670 = vtos %v669
      %v671 = vsel %vm654, %v646, 0.0
      %v672 = vsel %vm654, %v647, 0.0
      %v673 = vadd.f32 %v671, %v672
      %v674 = vsel %vm654, %v648, 0.0
      %v675 = vadd.f32 %v673, %v674
      %v676 = vsel %vm654, %v649, 0.0
      %v677 = vadd.f32 %v675, %v676
      %678 = vadd.xlane.f32.xlu0 %v677
      %v679 = vpop.xlane.xlu0 %678
      %v680 = vrot.slane %v679, 4
      %v681 = vadd.f32 %v679, %v680
      %v682 = vrot.slane %v681, 2
      %v683 = vadd.f32 %v681, %v682
      %v684 = vrot.slane %v683, 1
      %v685 = vadd.f32 %v683, %v684
      %s686 = vtos %v685
      %v687 = vlaneseq
      %v688 = vshrl.u32 %v687, 7
      %vm689 = vcmp.eq.s32.totalorder %v688, 0
      %vm690 = vcmp.eq.s32.totalorder %v609, 0
      %vm691 = vmand %vm689, %vm690
      %vm692 = vcmp.eq.s32.totalorder %v609, 1
      %vm693 = vmand %vm689, %vm692
      %v694 = vstv %s686
      %v695 = vsel %vm693, %v694, 0.0
      %v696 = vstv %s670
      %v697 = vsel %vm691, %v696, %v695
      %698 = vst [vmem:[%s309] sm:$0xff] %v697
      %s699 = smul.u32 4, %s19
      %p700 = scmp.lt.s32.totalorder %s699, 7
      %s701 = scalar_select %p700, %s699, 7
      %s702 = smul.addr %s701, 8
      %s703 = scalar_lea.vmem %s6, %s702
      %p704 = scmp.lt.s32.totalorder %s19, 1
      %s705 = scalar_select %p704, %s19, 1
      %s706 = smul.addr %s705, 8
      %s707 = scalar_lea.vmem %s7, %s706
      // Predicated region
      $region45: #{slu_tagging_forward.1} parent=43 // pred_check
        %p708 = pneg %p173
      $region46: #{slu_tagging_forward.1} parent=43 // pred_check_branch
        %710 = sbr.rel (%p708) target = $region48
      $region47: #{slu_tagging_forward.1} parent=43 // pred_region
        %s711 = smul.u32 4, %s19
      $region48: #{slu_tagging_forward.1} parent=43 // pred_fallthru
        _
      // Predicated region
      $region49: #{slu_tagging_forward.1} parent=43 // pred_check
        %p712 = pneg %p199
      $region50: #{slu_tagging_forward.1} parent=43 // pred_check_branch
        %714 = sbr.rel (%p712) target = $region52
      $region51: #{slu_tagging_forward.1} parent=43 // pred_region
        _
      $region52: #{slu_tagging_forward.1} parent=43 // pred_fallthru
        _
    $region44: #{slu_tagging_forward.1} parent=5 // pred_fallthru
      _
    %p715 = scmp.le.s32.totalorder 2, %s14
    // Predicated region
    $region53: #{slu_tagging_forward.1} parent=5 // pred_check
      %p716 = pneg %p715
    $region54: #{slu_tagging_forward.1} parent=5 // pred_check_branch
      %718 = sbr.rel (%p716) target = $region56
    $region55: #{slu_tagging_forward.1} parent=5 // pred_region
      %s719 = ssub.s32 %s14, 2
      // Predicated region
      $region57: #{slu_tagging_forward.1} parent=55 // pred_check
        %p720 = pneg %p179
      $region58: #{slu_tagging_forward.1} parent=55 // pred_check_branch
        %722 = sbr.rel (%p720) target = $region60
      $region59: #{slu_tagging_forward.1} parent=55 // pred_region
        %s723 = smul.u32 4, %s20
        %p724 = scmp.lt.s32.totalorder %s723, 7
        %s725 = scalar_select %p724, %s723, 7
        %s726 = smul.addr %s725, 8
        %s727 = scalar_lea.vmem %s6, %s726
      $region60: #{slu_tagging_forward.1} parent=55 // pred_fallthru
        _
      // Predicated region
      $region61: #{slu_tagging_forward.1} parent=55 // pred_check
        %p728 = pneg %p205
      $region62: #{slu_tagging_forward.1} parent=55 // pred_check_branch
        %730 = sbr.rel (%p728) target = $region64
      $region63: #{slu_tagging_forward.1} parent=55 // pred_region
        %p731 = scmp.lt.s32.totalorder %s20, 1
        %s732 = scalar_select %p731, %s20, 1
        %s733 = smul.addr %s732, 8
        %s734 = scalar_lea.vmem %s7, %s733
      $region64: #{slu_tagging_forward.1} parent=55 // pred_fallthru
        _
    $region56: #{slu_tagging_forward.1} parent=5 // pred_fallthru
      _
  $region6: #{slu_tagging_forward.1} parent=0 // loop_footer
    %s18 = sadd.s32 1, %s14
  $region7: #{slu_tagging_forward.1} parent=0 // loop_footer_branch
    %13 = sbr.rel target = $region3
  $region8: #{slu_tagging_forward.1} parent=0 // loop_exit
    _

</llo_original>
